<compile_context>
chip_gen: v7x
topology: tpu7x:2x2x1
jax: 0.10.0
libtpu: 0.0.40
codegen_flags: <defaults>
</compile_context>

<pallas_src>
import functools

import jax
import jax.numpy as jnp
from jax.experimental import pallas as pl
from jax.experimental.pallas import tpu as pltpu


# --------------------------------------------------------------------------- #
# Kernels
# --------------------------------------------------------------------------- #
def score_kernel(hproj_ref, enc_ref, we_ref, v_ref, out_ref, *, mxu_bf16):
    # hproj_ref: (tb, H)     hidden @ Wh^T + bias (precomputed in the wrapper)
    # enc_ref  : (tt, tb, H) encoder outputs, original seq-first [T, B, H] layout
    # we_ref   : (H, H)      W[:, H:]^T (encoder -> energy projection), resident
    # v_ref    : (1, H)      scoring vector (row)
    # out_ref  : (tb, tt)    raw (pre-softmax) attention scores, lane-dense on T
    tt, tb, H = enc_ref.shape

    # One merged MXU matmul over all tt timesteps.  The leading-dim collapse
    # (tt, tb, H) -> (tt*tb, H) is layout-free because tb % 8 == 0.
    enc2d = enc_ref[...].reshape(tt * tb, H)
    we = we_ref[...]
    if mxu_bf16:
        enc2d = enc2d.astype(jnp.bfloat16)
        we = we.astype(jnp.bfloat16)
    proj = jnp.dot(enc2d, we, preferred_element_type=jnp.float32)   # (tt*tb, H)

    # Elementwise path stays f32 (v5e has no bf16 VPU/EUP).
    energy = jnp.tanh(proj.reshape(tt, tb, H) + hproj_ref[...][None])  # (tt,tb,H)
    score = jnp.sum(energy * v_ref[...][None], axis=-1)                # (tt, tb)
    # Single small XLU transpose instead of T column concatenates.
    out_ref[...] = score.T.astype(out_ref.dtype)                       # (tb, tt)


def softmax_kernel(s_ref, o_ref):
    # s_ref/o_ref: (tbs, T) — softmax along the lane (T) axis.
    s = s_ref[...]
    m = jnp.max(s, axis=-1, keepdims=True)
    e = jnp.exp(s - m)
    denom = jnp.sum(e, axis=-1, keepdims=True)
    o_ref[...] = (e * pl.reciprocal(denom, approx=True)).astype(o_ref.dtype)


# --------------------------------------------------------------------------- #
# Tile selection (VMEM-aware)
# --------------------------------------------------------------------------- #
def _round_up(x, m):
    return (x + m - 1) // m * m


def _divisors_desc(n):
    return [d for d in range(n, 0, -1) if n % d == 0]


def _pick_score_tiles(T, Bp, H, enc_elem_bytes, enc_block_budget=4 << 20):
    """Pick (tb, tt) for the score kernel.

    Constraints:
      * tb divides Bp, tb % 8 == 0 (Bp is padded), so the in-kernel
        (tt, tb, H) -> (tt*tb, H) collapse is layout-free.
      * tt divides T and (tt == T or tt % 128 == 0) so the (tb, tt) score
        block is an unmasked, lane-dense store.
      * enc block (tt * tb * H elements) capped at ~4 MiB per buffer — the
        measured tile-size curve hits 85%+ of HBM roofline with multi-MB
        blocks, and double-buffered blocks stay far under v7x's 64 MiB VMEM.
      * When Bp >= 16, prefer tb <= Bp // 2 so the batch grid axis has >= 2
        parallel steps (v7x dual TensorCore).
    """
    tb_opts = [d for d in _divisors_desc(Bp) if d <= 128 and d % 8 == 0]
    if Bp >= 16:
        halved = [d for d in tb_opts if d <= Bp // 2]
        tb_opts = halved or tb_opts
    tt_opts = [d for d in _divisors_desc(T) if d == T or d % 128 == 0]
    for tb in tb_opts:
        for tt in tt_opts:
            if tt * tb * H * enc_elem_bytes <= enc_block_budget:
                return tb, tt
    # Nothing fits the budget: fall back to the smallest legal tiles.
    return tb_opts[-1], tt_opts[-1]


# --------------------------------------------------------------------------- #
# Wrapper
# --------------------------------------------------------------------------- #
def attention_forward(hidden, encoder_outputs, w, b, v, *, mxu_bf16=False):
    """hidden: [B, H], encoder_outputs: [T, B, H], w: [H, 2H], b: [H], v: [H]
    ->  [B, 1, T] attention weights (matches the PyTorch module's forward)."""
    T, B, H = encoder_outputs.shape
    assert hidden.shape == (B, H)
    assert w.shape == (H, 2 * H) and b.shape == (H,) and v.shape == (H,)

    # Hoisted hidden-side projection (no T dependence): one XLA matmul.
    # Linear([h; enc]) == h @ Wh^T + enc @ We^T + b.
    wh_t = jnp.transpose(w[:, :H])          # (H, H)
    we_t = jnp.transpose(w[:, H:])          # (H, H)
    hproj = hidden @ wh_t + b[None, :]      # (B, H)
    v_row = v.reshape(1, H)

    # Pad batch to a sublane multiple so every block tiles/reshapes cleanly.
    # Padded rows produce finite garbage scores that are sliced off at the end.
    # (Only copies enc when B % 8 != 0; typical large batches skip this.)
    Bp = _round_up(B, 8)
    if Bp != B:
        hproj = jnp.pad(hproj, ((0, Bp - B), (0, 0)))
        encoder_outputs = jnp.pad(encoder_outputs, ((0, 0), (0, Bp - B), (0, 0)))

    enc_elem = encoder_outputs.dtype.itemsize
    tb, tt = _pick_score_tiles(T, Bp, H, enc_elem)
    assert Bp % tb == 0 and T % tt == 0

    # Explicit VMEM limit: double-buffered blocks (+ resident weights) with 2x
    # headroom, capped below v7x's 64 MiB physical VMEM.
    block_bytes = (2 * tt * tb * H * enc_elem      # enc blocks (double-buffered)
                   + 2 * tb * H * 4                # hproj blocks
                   + 2 * H * H * 4                 # We^T
                   + 2 * H * 4                     # v
                   + 2 * tb * tt * 4)              # score output blocks
    vmem_limit = int(min(56 << 20, max(4 << 20, 2 * block_bytes)))

    # -------- Phase 1: raw scores, grid over (batch tiles, T tiles) --------
    scores = pl.pallas_call(
        functools.partial(score_kernel, mxu_bf16=mxu_bf16),
        out_shape=jax.ShapeDtypeStruct((Bp, T), jnp.float32),
        grid=(Bp // tb, T // tt),
        in_specs=[
            pl.BlockSpec((tb, H), lambda i, j: (i, 0)),         # hproj
            pl.BlockSpec((tt, tb, H), lambda i, j: (j, i, 0)),  # enc, [T,B,H] layout
            pl.BlockSpec((H, H), lambda i, j: (0, 0)),          # We^T (resident)
            pl.BlockSpec((1, H), lambda i, j: (0, 0)),          # v
        ],
        out_specs=pl.BlockSpec((tb, tt), lambda i, j: (i, j)),
        compiler_params=pltpu.CompilerParams(
            dimension_semantics=("parallel", "parallel"),
            vmem_limit_bytes=vmem_limit,
        ),
    )(hproj, encoder_outputs, we_t, v_row)                       # (Bp, T)

    # -------- Phase 2: softmax over T on the tiny (Bp, T) score slab --------
    tbs_opts = [d for d in _divisors_desc(Bp) if d % 8 == 0]
    tbs = next((d for d in tbs_opts if d * T * 4 <= (2 << 20)), tbs_opts[-1])
    weights = pl.pallas_call(
        softmax_kernel,
        out_shape=jax.ShapeDtypeStruct((Bp, T), jnp.float32),
        grid=(Bp // tbs,),
        in_specs=[pl.BlockSpec((tbs, T), lambda i: (i, 0))],
        out_specs=pl.BlockSpec((tbs, T), lambda i: (i, 0)),
        compiler_params=pltpu.CompilerParams(
            dimension_semantics=("parallel",)),
    )(scores)                                                    # (Bp, T)

    return weights[:B, None, :]                                  # (B, 1, T)


# --------------------------------------------------------------------------- #
# Pure-JAX reference mirroring the PyTorch forward exactly
# --------------------------------------------------------------------------- #
def attention_reference(hidden, encoder_outputs, w, b, v):
    T, B, H = encoder_outputs.shape
    h = jnp.broadcast_to(hidden[None], (T, B, H)).transpose(1, 0, 2)  # [B, T, H]
    enc = encoder_outputs.transpose(1, 0, 2)                          # [B, T, H]
    cat = jnp.concatenate([h, enc], axis=2)                           # [B, T, 2H]
    energy = jnp.tanh(cat @ w.T + b)                                  # [B, T, H]
    score = jnp.einsum("bth,h->bt", energy, v)                        # [B, T]
    return jax.nn.softmax(score, axis=1)[:, None, :]                  # [B, 1, T]


if __name__ == "__main__":
    H = 32   # hidden_size (small for the example; module default is 256)
    T = 8    # encoder timesteps
    B = 2    # batch

    key = jax.random.PRNGKey(0)
    k1, k2, k3, k4, k5 = jax.random.split(key, 5)

    # Deterministic synthetic parameters (shapes from Attention.__init__).
    bound = 1.0 / jnp.sqrt(2.0 * H)
    w = jax.random.uniform(k1, (H, 2 * H), jnp.float32, -bound, bound)  # attn.weight
    b = jax.random.uniform(k2, (H,), jnp.float32, -bound, bound)        # attn.bias
    v = jax.random.uniform(k3, (H,), jnp.float32, 0.0, 1.0)             # self.v

    # Inputs.
    hidden = jax.random.normal(k4, (B, H), jnp.float32)
    encoder_outputs = jax.random.normal(k5, (T, B, H), jnp.float32)

    out = attention_forward(hidden, encoder_outputs, w, b, v)
    out = jax.block_until_ready(out)

    ref = attention_reference(hidden, encoder_outputs, w, b, v)
    assert out.shape == (B, 1, T)
    # Tolerance relaxed to 2e-3 because the softmax denominator uses the EUP's
    # approximate reciprocal (pl.reciprocal(approx=True)).
    assert jnp.allclose(out, ref, atol=2e-3, rtol=2e-3)

    print("KERNEL_OK")
</pallas_src>

<mosaic_0001>
module attributes {stable_mosaic.version = 11 : i64} {
  func.func @score_kernel(%arg0: i32, %arg1: i32, %arg2: memref<8x32xf32, #tpu.memory_space<vmem>>, %arg3: memref<8x8x32xf32, #tpu.memory_space<vmem>>, %arg4: memref<32x32xf32, #tpu.memory_space<vmem>>, %arg5: memref<1x32xf32, #tpu.memory_space<vmem>>, %arg6: memref<8x8xf32, #tpu.memory_space<vmem>>) attributes {dimension_semantics = [#tpu.dimension_semantics<parallel>, #tpu.dimension_semantics<parallel>], iteration_bounds = array<i64: 1, 1>, scalar_prefetch = 0 : i64, scratch_operands = 0 : i64, tpu.core_type = #tpu.core_type<tc>, window_params = [{transform_indices = @transform_0, window_bounds = array<i64: 8, 32>}, {transform_indices = @transform_1, window_bounds = array<i64: 8, 8, 32>}, {pipeline_mode = #tpu.pipeline_mode<synchronous>, transform_indices = @transform_2, window_bounds = array<i64: 32, 32>}, {pipeline_mode = #tpu.pipeline_mode<synchronous>, transform_indices = @transform_3, window_bounds = array<i64: 1, 32>}, {transform_indices = @transform_4, window_bounds = array<i64: 8, 8>}]} {
    %c0 = arith.constant 0 : index
    %c0_0 = arith.constant 0 : index
    %c0_1 = arith.constant 0 : index
    %0 = vector.load %arg3[%c0, %c0_0, %c0_1] : memref<8x8x32xf32, #tpu.memory_space<vmem>>, vector<8x8x32xf32>
    %1 = vector.shape_cast %0 : vector<8x8x32xf32> to vector<64x32xf32>
    %c0_2 = arith.constant 0 : index
    %c0_3 = arith.constant 0 : index
    %2 = vector.load %arg4[%c0_2, %c0_3] : memref<32x32xf32, #tpu.memory_space<vmem>>, vector<32x32xf32>
    %cst = arith.constant dense<0.000000e+00> : vector<64x32xf32>
    %3 = tpu.matmul %1, %2, %cst {dimension_numbers = #tpu.dot_dimension_numbers<[1], [0], [0], [1], [0, 0, 1, 1], [], []>} : vector<64x32xf32>, vector<32x32xf32>, vector<64x32xf32> -> vector<64x32xf32>
    %4 = vector.shape_cast %3 : vector<64x32xf32> to vector<8x8x32xf32>
    %c0_4 = arith.constant 0 : index
    %c0_5 = arith.constant 0 : index
    %5 = vector.load %arg2[%c0_4, %c0_5] : memref<8x32xf32, #tpu.memory_space<vmem>>, vector<8x32xf32>
    %6 = vector.shape_cast %5 : vector<8x32xf32> to vector<1x8x32xf32>
    %7 = vector.broadcast %6 : vector<1x8x32xf32> to vector<8x8x32xf32>
    %8 = arith.addf %4, %7 : vector<8x8x32xf32>
    %9 = math.tanh %8 : vector<8x8x32xf32>
    %c0_6 = arith.constant 0 : index
    %c0_7 = arith.constant 0 : index
    %10 = vector.load %arg5[%c0_6, %c0_7] : memref<1x32xf32, #tpu.memory_space<vmem>>, vector<1x32xf32>
    %11 = vector.shape_cast %10 : vector<1x32xf32> to vector<1x1x32xf32>
    %12 = vector.broadcast %11 : vector<1x1x32xf32> to vector<8x8x32xf32>
    %13 = arith.mulf %9, %12 : vector<8x8x32xf32>
    %cst_8 = arith.constant dense<0.000000e+00> : vector<8x8xf32>
    %14 = vector.multi_reduction <add>, %13, %cst_8 [2] : vector<8x8x32xf32> to vector<8x8xf32>
    %15 = tpu.transpose %14, [1, 0] : vector<8x8xf32> -> vector<8x8xf32>
    %c0_9 = arith.constant 0 : index
    %c0_10 = arith.constant 0 : index
    %16 = vector.load %arg6[%c0_9, %c0_10] : memref<8x8xf32, #tpu.memory_space<vmem>>, vector<8x8xf32>
    tpu.vector_store %arg6[%c0_9, %c0_10], %15 {strides = array<i32>} : memref<8x8xf32, #tpu.memory_space<vmem>>, vector<8x8xf32>,
    return
  }
  func.func @transform_0(%arg0: i32, %arg1: i32) -> (i32, i32) {
    %c0_i32 = arith.constant 0 : i32
    %c0_i32_0 = arith.constant 0 : i32
    return %arg0, %c0_i32 : i32, i32
  }
  func.func @transform_1(%arg0: i32, %arg1: i32) -> (i32, i32, i32) {
    %c0_i32 = arith.constant 0 : i32
    %c0_i32_0 = arith.constant 0 : i32
    return %arg1, %arg0, %c0_i32 : i32, i32, i32
  }
  func.func @transform_2(%arg0: i32, %arg1: i32) -> (i32, i32) {
    %c0_i32 = arith.constant 0 : i32
    %c0_i32_0 = arith.constant 0 : i32
    %c0_i32_1 = arith.constant 0 : i32
    return %c0_i32, %c0_i32_0 : i32, i32
  }
  func.func @transform_3(%arg0: i32, %arg1: i32) -> (i32, i32) {
    %c0_i32 = arith.constant 0 : i32
    %c0_i32_0 = arith.constant 0 : i32
    %c0_i32_1 = arith.constant 0 : i32
    return %c0_i32, %c0_i32_0 : i32, i32
  }
  func.func @transform_4(%arg0: i32, %arg1: i32) -> (i32, i32) {
    %c0_i32 = arith.constant 0 : i32
    return %arg0, %arg1 : i32, i32
  }
}

</mosaic_0001>

<llo_original>
// kernel: tpu_custom_call.1
$region0: #{tpu_custom_call.1}
  #allocation0 [shape = 'u32[]', space=smem, size = 0x4, offset = 0x4, fixed_abs, tag = 'smem constant byte address 0x4 - core index']
  #allocation1 [shape = 'u32[144,128]{1,0:T(1,128)}', space=vmem, size = 0x12000, scoped, tag = 'internal scratch']
  %s0 = inlined_call_operand.hbm [shape: f32[8,32], index: 0, kind: input, shape index: {}]
  %s1 = inlined_call_operand.hbm [shape: f32[8,8,32], index: 1, kind: input, shape index: {}]
  %s2 = inlined_call_operand.hbm [shape: f32[32,32], index: 2, kind: input, shape index: {}]
  %s3 = inlined_call_operand.vmem [shape: f32[1,32], index: 3, kind: input, shape index: {}]
  %s4 = inlined_call_operand.hbm [shape: f32[8,8], index: 4, kind: output, shape index: {}]
  %s5 = sld [smem:[#allocation0]]
  $region38: #{tpu_custom_call.1} parent=0
    _
  %s7 = ssub.s32 1, %s5
  %s8 = scalar_select 0, %s7, %s5
  $region1: #{tpu_custom_call.1} parent=0
    #allocation2 [shape = 'u8[4096]{0}', space=vmem, size = 0x1000, scoped, tag = 'input window, operand 0, single buffered']
    #allocation3 [shape = 's32[1]{0}', space=sflag, size = 0x4, scoped, tag = 'scoped memory for tpu_custom_call.1']
    #allocation4 [shape = 's32[1]{0}', space=sflag, size = 0x4, scoped, tag = 'scoped memory for tpu_custom_call.1']
    #allocation5 [shape = 'u8[32768]{0}', space=vmem, size = 0x8000, scoped, tag = 'input window, operand 1, single buffered']
    #allocation6 [shape = 's32[1]{0}', space=sflag, size = 0x4, scoped, tag = 'scoped memory for tpu_custom_call.1']
    #allocation7 [shape = 'u8[16384]{0}', space=vmem, size = 0x4000, scoped, tag = 'input window, operand 2, single buffered']
    #allocation8 [shape = 'u8[4096]{0}', space=vmem, size = 0x1000, scoped, tag = 'output window, operand 0, single buffered']
    %9 = vsyncpa [#allocation3], 0
    %10 = vsyncpa [#allocation6], 0
    %11 = vsyncpa [#allocation4], 0
    // Predicated region
    $region2: #{tpu_custom_call.1} parent=1 // pred_check
      _
    $region3: #{tpu_custom_call.1} parent=1 // pred_check_branch
      %13 = sbr.rel (0) target = $region5
    $region4: #{tpu_custom_call.1} parent=1 // pred_region
      %s15 = ssub.s32 128, 128
      %16 = vsyncadd [#allocation3], %s15
      %s18 = sshll.u32 [#allocation2], 4
      %s19 = int_to_ptr.vmem [resolvable:$true] %s18
      %21 = dma.hbm_to_vmem [thread:$0]  %s0, 128, %s19, [#allocation3]
    $region5: #{tpu_custom_call.1} parent=1 // pred_fallthru
      _
    // Predicated region
    $region6: #{tpu_custom_call.1} parent=1 // pred_check
      _
    $region7: #{tpu_custom_call.1} parent=1 // pred_check_branch
      %23 = sbr.rel (0) target = $region9
    $region8: #{tpu_custom_call.1} parent=1 // pred_region
      %s25 = ssub.s32 1024, 1024
      %26 = vsyncadd [#allocation6], %s25
      %s27 = sshll.u32 [#allocation5], 4
      %s28 = int_to_ptr.vmem [resolvable:$true] %s27
      %33 = dma.hbm_to_vmem [thread:$0]  %s1, 1024, %s28, [#allocation6], 128, 128, 8
    $region9: #{tpu_custom_call.1} parent=1 // pred_fallthru
      _
    // Predicated region
    $region10: #{tpu_custom_call.1} parent=1 // pred_check
      _
    $region11: #{tpu_custom_call.1} parent=1 // pred_check_branch
      %35 = sbr.rel (0) target = $region13
    $region12: #{tpu_custom_call.1} parent=1 // pred_region
      %s37 = ssub.s32 512, 512
      %38 = vsyncadd [#allocation6], %s37
      %s39 = sshll.u32 [#allocation7], 4
      %s40 = int_to_ptr.vmem [resolvable:$true] %s39
      %45 = dma.hbm_to_vmem [thread:$0]  %s2, 512, %s40, [#allocation6], 128, 128, 8
    $region13: #{tpu_custom_call.1} parent=1 // pred_fallthru
      _
    // Predicated region
    $region14: #{tpu_custom_call.1} parent=1 // pred_check
      _
    $region15: #{tpu_custom_call.1} parent=1 // pred_check_branch
      %47 = sbr.rel (0) target = $region17
    $region16: #{tpu_custom_call.1} parent=1 // pred_region
      _
    $region17: #{tpu_custom_call.1} parent=1 // pred_fallthru
      _
    // Predicated region
    $region18: #{tpu_custom_call.1} parent=1 // pred_check
      _
    $region19: #{tpu_custom_call.1} parent=1 // pred_check_branch
      %49 = sbr.rel (0) target = $region21
    $region20: #{tpu_custom_call.1} parent=1 // pred_region
      %50 = dma.done [#allocation3], 128
    $region21: #{tpu_custom_call.1} parent=1 // pred_fallthru
      _
    // Predicated region
    $region22: #{tpu_custom_call.1} parent=1 // pred_check
      _
    $region23: #{tpu_custom_call.1} parent=1 // pred_check_branch
      %52 = sbr.rel (0) target = $region25
    $region24: #{tpu_custom_call.1} parent=1 // pred_region
      %53 = dma.done [#allocation6], 1024
    $region25: #{tpu_custom_call.1} parent=1 // pred_fallthru
      _
    // Predicated region
    $region26: #{tpu_custom_call.1} parent=1 // pred_check
      _
    $region27: #{tpu_custom_call.1} parent=1 // pred_check_branch
      %55 = sbr.rel (0) target = $region29
    $region28: #{tpu_custom_call.1} parent=1 // pred_region
      %56 = dma.done [#allocation6], 512
    $region29: #{tpu_custom_call.1} parent=1 // pred_fallthru
      _
    %v57 = vld [vmem:[#allocation5] sm:$0xff]
    %v58 = vld [vmem:[#allocation5 + $0x8] sm:$0xff]
    %v59 = vld [vmem:[#allocation5 + $0x10] sm:$0xff]
    %v60 = vld [vmem:[#allocation5 + $0x18] sm:$0xff]
    %v61 = vld [vmem:[#allocation5 + $0x20] sm:$0xff]
    %v62 = vld [vmem:[#allocation5 + $0x28] sm:$0xff]
    %v63 = vld [vmem:[#allocation5 + $0x30] sm:$0xff]
    %v64 = vld [vmem:[#allocation5 + $0x38] sm:$0xff]
    %v65 = vld [vmem:[#allocation7] sm:$0xff]
    %v66 = vld [vmem:[#allocation7 + $0x8] sm:$0xff]
    %v67 = vld [vmem:[#allocation7 + $0x10] sm:$0xff]
    %v68 = vld [vmem:[#allocation7 + $0x18] sm:$0xff]
    %vm69 = vcmask 261120
    %v71 = vsel %vm69, %v57, 0
    %v74 = vsel %vm69, %v58, 0
    %v77 = vsel %vm69, %v59, 0
    %v80 = vsel %vm69, %v60, 0
    %v83 = vsel %vm69, %v61, 0
    %v86 = vsel %vm69, %v62, 0
    %v89 = vsel %vm69, %v63, 0
    %v92 = vsel %vm69, %v64, 0
    %94 = vmatprep.subr.mxu0 0.0
    %95 = vmatpush1.msra.mxu0 %v65
    %96 = vmatprep.subr.mxu0 0.0
    %97 = vmatpush1.msra.mxu0 %v66
    %98 = vmatprep.subr.mxu0 0.0
    %99 = vmatpush1.msra.mxu0 %v67
    %100 = vmatprep.subr.mxu0 0.0
    %101 = vmatpush1.msra.mxu0 %v68
    %102 = vmatprep.subr.mxu0 0.0
    %103 = vmatpush1.msra.mxu0 0.0
    %104 = vmatprep.subr.mxu0 0.0
    %105 = vmatpush1.msra.mxu0 0.0
    %106 = vmatprep.subr.mxu0 0.0
    %107 = vmatpush1.msra.mxu0 0.0
    %108 = vmatprep.subr.mxu0 0.0
    %109 = vmatpush1.msra.mxu0 0.0
    %110 = vmatprep.subr.mxu0 0.0
    %111 = vmatpush1.msra.mxu0 0.0
    %112 = vmatprep.subr.mxu0 0.0
    %113 = vmatpush1.msra.mxu0 0.0
    %114 = vmatprep.subr.mxu0 0.0
    %115 = vmatpush1.msra.mxu0 0.0
    %116 = vmatprep.subr.mxu0 0.0
    %117 = vmatpush1.msra.mxu0 0.0
    %118 = vmatprep.subr.mxu0 0.0
    %119 = vmatpush1.msra.mxu0 0.0
    %120 = vmatprep.subr.mxu0 0.0
    %121 = vmatpush1.msra.mxu0 0.0
    %122 = vmatprep.subr.mxu0 0.0
    %123 = vmatpush1.msra.mxu0 0.0
    %124 = vmatprep.subr.mxu0 0.0
    %125 = vmatpush1.msra.mxu0 0.0
    %126 = vmatprep.subr.mxu0 0.0
    %127 = vmatpush1.msra.mxu0 0.0
    %128 = vmatprep.subr.mxu0 0.0
    %129 = vmatpush1.msra.mxu0 0.0
    %130 = vmatprep.subr.mxu0 0.0
    %131 = vmatpush1.msra.mxu0 0.0
    %132 = vmatprep.subr.mxu0 0.0
    %133 = vmatpush1.msra.mxu0 0.0
    %134 = vmatprep.subr.mxu0 0.0
    %135 = vmatpush1.msra.mxu0 0.0
    %136 = vmatprep.subr.mxu0 0.0
    %137 = vmatpush1.msra.mxu0 0.0
    %138 = vmatprep.subr.mxu0 0.0
    %139 = vmatpush1.msra.mxu0 0.0
    %140 = vmatprep.subr.mxu0 0.0
    %141 = vmatpush1.msra.mxu0 0.0
    %142 = vmatprep.subr.mxu0 0.0
    %143 = vmatpush1.msra.mxu0 0.0
    %144 = vmatprep.subr.mxu0 0.0
    %145 = vmatpush1.msra.mxu0 0.0
    %146 = vmatprep.subr.mxu0 0.0
    %147 = vmatpush1.msra.mxu0 0.0
    %148 = vmatprep.subr.mxu0 0.0
    %149 = vmatpush1.msra.mxu0 0.0
    %150 = vmatprep.subr.mxu0 0.0
    %151 = vmatpush1.msra.mxu0 0.0
    %152 = vmatprep.subr.mxu0 0.0
    %153 = vmatpush1.msra.mxu0 0.0
    %154 = vmatprep.subr.mxu0 0.0
    %155 = vmatpush1.msra.mxu0 0.0
    %156 = vmatprep.subr.mxu0 0.0
    %157 = vmatpush1.msra.mxu0 0.0
    %158 = vmatprep.mubr.f32.mxu0 0.0
    %159 = vmatmul.mubr.f32.gmra.mrb[0].mxu0 %v71
    %v160 = vpop.f32.mrb[0].mxu0
    %v161 = vadd.f32 0.0, %v160
    %v162 = vpop.f32.mrb[0].mxu0
    %163 = vmatprep.mubr.f32.mxu0 0.0
    %164 = vmatmul.mubr.f32.gmra.mrb[0].mxu0 %v74
    %v165 = vpop.f32.mrb[0].mxu0
    %v166 = vadd.f32 0.0, %v165
    %v167 = vpop.f32.mrb[0].mxu0
    %168 = vmatprep.mubr.f32.mxu0 0.0
    %169 = vmatmul.mubr.f32.gmra.mrb[0].mxu0 %v77
    %v170 = vpop.f32.mrb[0].mxu0
    %v171 = vadd.f32 0.0, %v170
    %v172 = vpop.f32.mrb[0].mxu0
    %173 = vmatprep.mubr.f32.mxu0 0.0
    %174 = vmatmul.mubr.f32.gmra.mrb[0].mxu0 %v80
    %v175 = vpop.f32.mrb[0].mxu0
    %v176 = vadd.f32 0.0, %v175
    %v177 = vpop.f32.mrb[0].mxu0
    %178 = vmatprep.mubr.f32.mxu0 0.0
    %179 = vmatmul.mubr.f32.gmra.mrb[0].mxu0 %v83
    %v180 = vpop.f32.mrb[0].mxu0
    %v181 = vadd.f32 0.0, %v180
    %v182 = vpop.f32.mrb[0].mxu0
    %183 = vmatprep.mubr.f32.mxu0 0.0
    %184 = vmatmul.mubr.f32.gmra.mrb[0].mxu0 %v86
    %v185 = vpop.f32.mrb[0].mxu0
    %v186 = vadd.f32 0.0, %v185
    %v187 = vpop.f32.mrb[0].mxu0
    %188 = vmatprep.mubr.f32.mxu0 0.0
    %189 = vmatmul.mubr.f32.gmra.mrb[0].mxu0 %v89
    %v190 = vpop.f32.mrb[0].mxu0
    %v191 = vadd.f32 0.0, %v190
    %v192 = vpop.f32.mrb[0].mxu0
    %193 = vmatprep.mubr.f32.mxu0 0.0
    %194 = vmatmul.mubr.f32.gmra.mrb[0].mxu0 %v92
    %v195 = vpop.f32.mrb[0].mxu0
    %v196 = vadd.f32 0.0, %v195
    %v197 = vpop.f32.mrb[0].mxu0
    %198 = vdwg.mxu0
    %v199 = vld [vmem:[#allocation2] sm:$0xff]
    %v200 = vadd.f32 %v161, %v199
    %v201 = vadd.f32 %v166, %v199
    %v202 = vadd.f32 %v171, %v199
    %v203 = vadd.f32 %v176, %v199
    %v204 = vadd.f32 %v181, %v199
    %v205 = vadd.f32 %v186, %v199
    %v206 = vadd.f32 %v191, %v199
    %v207 = vadd.f32 %v196, %v199
    %v208 = vtanh.pop %v200
    %v209 = vtanh.pop %v201
    %v210 = vtanh.pop %v202
    %v211 = vtanh.pop %v203
    %v212 = vtanh.pop %v204
    %v213 = vtanh.pop %v205
    %v214 = vtanh.pop %v206
    %v215 = vtanh.pop %v207
    %v216 = vld [vmem:[%s3] sm:$0x1]
    %v218 = vlaneseq
    %v219 = vshrl.u32 %v218, 7
    %v220 = vsub.s32 0, %v219
    %v221 = vrot.slane %v216, %v220
    %v223 = vmul.f32 %v208, %v221
    %v224 = vmul.f32 %v209, %v221
    %v225 = vmul.f32 %v210, %v221
    %v226 = vmul.f32 %v211, %v221
    %v227 = vmul.f32 %v212, %v221
    %v228 = vmul.f32 %v213, %v221
    %v229 = vmul.f32 %v214, %v221
    %v230 = vmul.f32 %v215, %v221
    %v231 = vsel %vm69, %v223, 0.0
    %232 = vadd.xlane.f32.xlu0 %v231
    %v233 = vpop.xlane.xlu0 %232
    %v234 = vsel %vm69, %v224, 0.0
    %235 = vadd.xlane.f32.xlu0 %v234
    %v236 = vpop.xlane.xlu0 %235
    %v237 = vsel %vm69, %v225, 0.0
    %238 = vadd.xlane.f32.xlu0 %v237
    %v239 = vpop.xlane.xlu0 %238
    %v240 = vsel %vm69, %v226, 0.0
    %241 = vadd.xlane.f32.xlu0 %v240
    %v242 = vpop.xlane.xlu0 %241
    %v243 = vsel %vm69, %v227, 0.0
    %244 = vadd.xlane.f32.xlu0 %v243
    %v245 = vpop.xlane.xlu0 %244
    %v246 = vsel %vm69, %v228, 0.0
    %247 = vadd.xlane.f32.xlu0 %v246
    %v248 = vpop.xlane.xlu0 %247
    %v249 = vsel %vm69, %v229, 0.0
    %250 = vadd.xlane.f32.xlu0 %v249
    %v251 = vpop.xlane.xlu0 %250
    %v252 = vsel %vm69, %v230, 0.0
    %253 = vadd.xlane.f32.xlu0 %v252
    %v254 = vpop.xlane.xlu0 %253
    %v263 = vlaneseq
    %v264 = vand.u32 %v263, 127
    %v265 = vlaneseq
    %v266 = vshrl.u32 %v265, 7
    %v267 = vsub.s32 %v264, %v266
    %v268 = vrot.slane %v233, %v267
    %v269 = vlaneseq
    %v270 = vshrl.u32 %v269, 7
    %v271 = vsub.s32 %v264, %v270
    %v272 = vrot.slane %v236, %v271
    %v273 = vlaneseq
    %v274 = vshrl.u32 %v273, 7
    %v275 = vsub.s32 %v264, %v274
    %v276 = vrot.slane %v239, %v275
    %v277 = vlaneseq
    %v278 = vshrl.u32 %v277, 7
    %v279 = vsub.s32 %v264, %v278
    %v280 = vrot.slane %v242, %v279
    %v281 = vlaneseq
    %v282 = vshrl.u32 %v281, 7
    %v283 = vsub.s32 %v264, %v282
    %v284 = vrot.slane %v245, %v283
    %v285 = vlaneseq
    %v286 = vshrl.u32 %v285, 7
    %v287 = vsub.s32 %v264, %v286
    %v288 = vrot.slane %v248, %v287
    %v289 = vlaneseq
    %v290 = vshrl.u32 %v289, 7
    %v291 = vsub.s32 %v264, %v290
    %v292 = vrot.slane %v251, %v291
    %v293 = vlaneseq
    %v294 = vshrl.u32 %v293, 7
    %v295 = vsub.s32 %v264, %v294
    %v296 = vrot.slane %v254, %v295
    %vm297 = vcmask 1041409
    %v298 = vsel %vm297, %v272, %v268
    %vm299 = vcmask 1042434
    %v300 = vsel %vm299, %v276, %v298
    %vm301 = vcmask 1043459
    %v302 = vsel %vm301, %v280, %v300
    %vm303 = vcmask 1044484
    %v304 = vsel %vm303, %v284, %v302
    %vm305 = vcmask 1045509
    %v306 = vsel %vm305, %v288, %v304
    %vm307 = vcmask 1046534
    %v308 = vsel %vm307, %v292, %v306
    %vm309 = vcmask 1047559
    %v310 = vsel %vm309, %v296, %v308
    %312 = vxpose.xlu0.b32.start [1/16] %v310, 128
    %313 = vxpose.xlu0.b32.cont [2/16] 0.0, 128
    %314 = vxpose.xlu0.b32.cont [3/16] 0.0, 128
    %315 = vxpose.xlu0.b32.cont [4/16] 0.0, 128
    %316 = vxpose.xlu0.b32.cont [5/16] 0.0, 128
    %317 = vxpose.xlu0.b32.cont [6/16] 0.0, 128
    %318 = vxpose.xlu0.b32.cont [7/16] 0.0, 128
    %319 = vxpose.xlu0.b32.cont [8/16] 0.0, 128
    %320 = vxpose.xlu0.b32.cont [9/16] 0.0, 128
    %321 = vxpose.xlu0.b32.cont [10/16] 0.0, 128
    %322 = vxpose.xlu0.b32.cont [11/16] 0.0, 128
    %323 = vxpose.xlu0.b32.cont [12/16] 0.0, 128
    %324 = vxpose.xlu0.b32.cont [13/16] 0.0, 128
    %325 = vxpose.xlu0.b32.cont [14/16] 0.0, 128
    %326 = vxpose.xlu0.b32.cont [15/16] 0.0, 128
    %327 = vxpose.xlu0.b32.end [16/16] 0.0, 128
    %v328 = vpop.trf.xlu0
    %v329 = vpop.trf.xlu0
    %v330 = vpop.trf.xlu0
    %v331 = vpop.trf.xlu0
    %v332 = vpop.trf.xlu0
    %v333 = vpop.trf.xlu0
    %v334 = vpop.trf.xlu0
    %v335 = vpop.trf.xlu0
    %v336 = vpop.trf.xlu0
    %v337 = vpop.trf.xlu0
    %v338 = vpop.trf.xlu0
    %v339 = vpop.trf.xlu0
    %v340 = vpop.trf.xlu0
    %v341 = vpop.trf.xlu0
    %v342 = vpop.trf.xlu0
    %v343 = vpop.trf.xlu0
    %vm344 = vcmask 64512
    %345 = vst.msk [vmem:[#allocation8] sm:$0xff] %vm344, %v328
    // Predicated region
    $region30: #{tpu_custom_call.1} parent=1 // pred_check
      _
    $region31: #{tpu_custom_call.1} parent=1 // pred_check_branch
      %347 = sbr.rel (0) target = $region33
    $region32: #{tpu_custom_call.1} parent=1 // pred_region
      %s349 = ssub.s32 128, 128
      %350 = vsyncadd [#allocation4], %s349
      %s352 = sshll.u32 [#allocation8], 4
      %s353 = int_to_ptr.vmem [resolvable:$true] %s352
      %355 = dma.vmem_to_hbm [thread:$0]  %s353, 128, %s4, [#allocation4]
    $region33: #{tpu_custom_call.1} parent=1 // pred_fallthru
      _
    // Predicated region
    $region34: #{tpu_custom_call.1} parent=1 // pred_check
      _
    $region35: #{tpu_custom_call.1} parent=1 // pred_check_branch
      %357 = sbr.rel (0) target = $region37
    $region36: #{tpu_custom_call.1} parent=1 // pred_region
      %358 = dma.done [#allocation4], 128
    $region37: #{tpu_custom_call.1} parent=1 // pred_fallthru
      _
    %359 = vsyncpa [#allocation3], 1
    %360 = vsyncpa [#allocation6], 1
    %361 = vsyncpa [#allocation4], 1

</llo_original>
